<compile_context>
chip_gen: v7x
topology: tpu7x:2x2x1
jax: 0.10.0
libtpu: 0.0.40
codegen_flags: <defaults>
</compile_context>

<pallas_src>
import functools

import jax
import jax.numpy as jnp
import numpy as np
from jax import lax
from jax.experimental import pallas as pl
from jax.experimental.pallas import tpu as pltpu


def _dense_layer_kernel(x_ref, s1_ref, b1_ref, w1_ref, b2_ref, w2_ref, m_ref,
                        o_ref, *, W, Rp, Cout_p):
    # x_ref:  (Bt, Cin, Rp)       Bt NCHW images, spatial flattened onto lanes
    # s1/b1:  (Cin, 1)            folded BN1 scale / bias (f32)
    # w1_ref: (Cmid, Cin)         1x1 conv weight with BN2 scale pre-folded
    # b2_ref: (Cmid, 1)           BN2 bias (f32)
    # w2_ref: (9*Cout_p, Cmid)    3x3 conv taps stacked along rows (tap = ky*3+kx),
    #                             each tap block zero-padded to Cout_p rows
    # m_ref:  (9*Cout_p, Rp)      source-coordinate boundary masks, 0/1 f32
    # o_ref:  (Bt, Cout_p, Rp)    NCHW output, spatial flattened onto lanes
    Bt = x_ref.shape[0]

    s1 = s1_ref[...]
    b1 = b1_ref[...]
    w1 = w1_ref[...]
    b2 = b2_ref[...]
    w2 = w2_ref[...]
    mall = m_ref[...]

    for b in range(Bt):                                     # static unroll
        # --- BN1 (folded) + ReLU1 (f32 elementwise; v5e has no bf16 VPU) ---
        x = x_ref[b].astype(jnp.float32)                    # (Cin, Rp)
        y1 = jnp.maximum(x * s1 + b1, 0.0)

        # --- conv1 (1x1) with BN2 scale folded in, + BN2 bias + ReLU2 ------
        z = jnp.dot(w1, y1.astype(w1.dtype),
                    preferred_element_type=jnp.float32)      # (Cmid, Rp)
        z = jnp.maximum(z + b2, 0.0)

        # --- conv2 (3x3, pad 1): ONE wide matmul over all 9 taps -----------
        t = jnp.dot(w2, z.astype(w2.dtype),
                    preferred_element_type=jnp.float32)      # (9*Cout_p, Rp)
        # One wide VPU multiply applies every tap's boundary mask (in source
        # coordinates), so the tap loop below is roll + add only.
        t = t * mall

        def slab(tap):
            dh = tap // 3 - 1
            dw = tap % 3 - 1
            off = dh * W + dw                   # out[r] <- t_tap[r + off]
            s = t[tap * Cout_p:(tap + 1) * Cout_p, :]   # sublane-aligned view
            if off == 0:
                return s
            return pltpu.roll(s, (-off) % Rp, axis=1)        # XLU, lane roll

        # Two independent accumulation chains -> shorter serial VALU chain.
        acc0 = slab(4)                                       # centre tap
        for tap in (0, 1, 2, 3):
            acc0 = acc0 + slab(tap)
        acc1 = slab(5)
        for tap in (6, 7, 8):
            acc1 = acc1 + slab(tap)

        o_ref[b] = (acc0 + acc1).astype(o_ref.dtype)         # lane-dense store


def _tap_masks(H, W, Rp, Cout_p):
    """(9*Cout_p, Rp) f32 source-coordinate masks, tap blocks repeated Cout_p x.

    For tap offset off = dh*W + dw the kernel computes
        roll(t_tap * m_src, (-off) % Rp)[r] = t_tap[r+off] * m_src[r+off]
    and we need that to equal t_tap[r+off] * m_dest[r], so m_src = roll(m_dest, off).
    Pad lanes (r >= H*W) are masked to zero.
    """
    R = H * W
    hh = np.arange(H)
    ww = np.arange(W)
    blocks = []
    for ky in range(3):
        for kx in range(3):
            dh, dw = ky - 1, kx - 1
            mh = (hh + dh >= 0) & (hh + dh < H)
            mw = (ww + dw >= 0) & (ww + dw < W)
            m_dest = (mh[:, None] & mw[None, :]).reshape(-1).astype(np.float32)
            m_dest = np.concatenate([m_dest, np.zeros(Rp - R, np.float32)])
            m_src = np.roll(m_dest, dh * W + dw)
            blocks.append(np.broadcast_to(m_src, (Cout_p, Rp)))
    return jnp.asarray(np.concatenate(blocks, axis=0))


def _pick_bt(N, Cin, Cmid, Cout_p, Rp, budget_bytes=2 * 1024 * 1024):
    """Images per grid step: amortize per-step overhead, stay VMEM-frugal."""
    per_image = 4 * Rp * (2 * Cin + Cmid + 10 * Cout_p)   # x, y1, z, t, out (f32)
    return int(max(1, min(N, 8, budget_bytes // max(per_image, 1))))


def dense_layer_forward(inputs, params, *, drop_rate=0.0,
                        matmul_dtype=jnp.bfloat16, out_dtype=None):
    """Pallas implementation of _DenseLayer.forward (inference / eval mode).

    inputs: NCHW array or list of NCHW arrays (concatenated over channels).
    Returns an NCHW array (N, growth_rate, H, W) in `out_dtype` (default: the
    input dtype).  matmul_dtype=jnp.bfloat16 is the default — the MXU is
    bf16-native on v5e, v6e and v7x; pass jnp.float32 for bit-tight validation.
    """
    if isinstance(inputs, (list, tuple)):
        x_nchw = jnp.concatenate(inputs, axis=1)          # torch.cat(inputs, 1)
    else:
        x_nchw = inputs

    # TODO(synk): F.dropout with training=True (drop_rate > 0) not implemented;
    # eval-mode dropout is identity, matching self.training == False.
    del drop_rate

    N, Cin, H, W = x_nchw.shape
    R = H * W
    Rp = ((R + 127) // 128) * 128                         # lane-dense spatial dim
    if out_dtype is None:
        out_dtype = x_nchw.dtype

    w2 = params["w2"]                                     # (Cout, Cmid, 3, 3) OIHW
    Cout, Cmid = w2.shape[0], w2.shape[1]
    Cout_p = ((Cout + 7) // 8) * 8                        # sublane-aligned tap slabs

    Bt = _pick_bt(N, Cin, Cmid, Cout_p, Rp)
    Np = ((N + Bt - 1) // Bt) * Bt

    # x stays in its native dtype (no forced f32 on the data path); the
    # NCHW -> (N, Cin, R) reshape is free (row-major).
    x = x_nchw.reshape(N, Cin, R)
    if Rp != R or Np != N:
        x = jnp.pad(x, ((0, Np - N), (0, 0), (0, Rp - R)))

    s1 = params["s1"].reshape(Cin, 1).astype(jnp.float32)
    b1 = params["b1"].reshape(Cin, 1).astype(jnp.float32)
    # Fold BN2 scale into the 1x1 conv weight; keep only the additive bias.
    w1f = (params["w1"] * params["s2"].reshape(-1, 1)).astype(matmul_dtype)
    b2 = params["b2"].reshape(-1, 1).astype(jnp.float32)
    # Stack the 9 taps along rows, each tap block zero-padded to Cout_p rows:
    # row block [tap*Cout_p : tap*Cout_p+Cout] = w2[:, :, ky, kx].
    w2_taps = jnp.transpose(w2, (2, 3, 0, 1)).reshape(9, Cout, Cmid)
    w2w = jnp.pad(w2_taps, ((0, 0), (0, Cout_p - Cout), (0, 0)))
    w2w = w2w.reshape(9 * Cout_p, Cmid).astype(matmul_dtype)
    mask_all = _tap_masks(H, W, Rp, Cout_p)               # (9*Cout_p, Rp)

    kernel = functools.partial(_dense_layer_kernel, W=W, Rp=Rp, Cout_p=Cout_p)

    out = pl.pallas_call(
        kernel,
        out_shape=jax.ShapeDtypeStruct((Np, Cout_p, Rp), out_dtype),
        grid_spec=pltpu.PrefetchScalarGridSpec(
            num_scalar_prefetch=0,
            grid=(Np // Bt,),
            in_specs=[
                pl.BlockSpec((Bt, Cin, Rp), lambda n: (n, 0, 0)),      # x
                pl.BlockSpec((Cin, 1), lambda n: (0, 0)),              # s1
                pl.BlockSpec((Cin, 1), lambda n: (0, 0)),              # b1
                pl.BlockSpec((Cmid, Cin), lambda n: (0, 0)),           # w1 (s2 folded)
                pl.BlockSpec((Cmid, 1), lambda n: (0, 0)),             # b2
                pl.BlockSpec((9 * Cout_p, Cmid), lambda n: (0, 0)),    # w2 taps
                pl.BlockSpec((9 * Cout_p, Rp), lambda n: (0, 0)),      # masks
            ],
            out_specs=pl.BlockSpec((Bt, Cout_p, Rp), lambda n: (n, 0, 0)),
        ),
        compiler_params=pltpu.CompilerParams(
            dimension_semantics=("parallel",),        # megacore-shardable axis
            vmem_limit_bytes=32 * 1024 * 1024),       # safe on v5e/v6e/v7x (64 MiB)
    )(x, s1, b1, w1f, b2, w2w, mask_all)

    # Drop batch / channel / lane padding; reshape back to NCHW (free).
    return out[:N, :Cout, :R].reshape(N, Cout, H, W)


def init_params(key, num_input_features, growth_rate, bn_size, eps=1e-5):
    """Deterministic synthetic parameters; BN running stats folded to scale/bias."""
    Cin = num_input_features
    Cmid = bn_size * growth_rate
    Cout = growth_rate
    ks = jax.random.split(key, 10)

    g1 = jax.random.uniform(ks[0], (Cin,), jnp.float32, 0.5, 1.5)
    be1 = 0.1 * jax.random.normal(ks[1], (Cin,), jnp.float32)
    m1 = 0.1 * jax.random.normal(ks[2], (Cin,), jnp.float32)
    v1 = jax.random.uniform(ks[3], (Cin,), jnp.float32, 0.5, 1.5)

    g2 = jax.random.uniform(ks[4], (Cmid,), jnp.float32, 0.5, 1.5)
    be2 = 0.1 * jax.random.normal(ks[5], (Cmid,), jnp.float32)
    m2 = 0.1 * jax.random.normal(ks[6], (Cmid,), jnp.float32)
    v2 = jax.random.uniform(ks[7], (Cmid,), jnp.float32, 0.5, 1.5)

    w1 = 0.1 * jax.random.normal(ks[8], (Cmid, Cin), jnp.float32)          # 1x1 (OI)
    w2 = 0.05 * jax.random.normal(ks[9], (Cout, Cmid, 3, 3), jnp.float32)  # 3x3 OIHW

    s1 = g1 / jnp.sqrt(v1 + eps)
    b1 = be1 - m1 * s1
    s2 = g2 / jnp.sqrt(v2 + eps)
    b2 = be2 - m2 * s2

    return {"s1": s1, "b1": b1, "w1": w1, "s2": s2, "b2": b2, "w2": w2}


def _reference_forward(x_nchw, params):
    """Plain-JAX (XLA) reference with identical math, for verification."""
    x = x_nchw.astype(jnp.float32)
    s1 = params["s1"].reshape(1, -1, 1, 1)
    b1 = params["b1"].reshape(1, -1, 1, 1)
    y1 = jnp.maximum(x * s1 + b1, 0.0)
    z = jnp.einsum("nihw,oi->nohw", y1, params["w1"])
    s2 = params["s2"].reshape(1, -1, 1, 1)
    b2 = params["b2"].reshape(1, -1, 1, 1)
    z = jnp.maximum(z * s2 + b2, 0.0)
    out = lax.conv_general_dilated(
        z, params["w2"], window_strides=(1, 1), padding=((1, 1), (1, 1)),
        dimension_numbers=("NCHW", "OIHW", "NCHW"))
    return out


if __name__ == "__main__":
    # _DenseLayer(num_input_features=4, growth_rate=8, bn_size=2, drop_rate=0.0)
    num_input_features, growth_rate, bn_size = 4, 8, 2
    N, H, W = 2, 16, 16

    key = jax.random.PRNGKey(0)
    k_x, k_p = jax.random.split(key)
    x = jax.random.normal(k_x, (N, num_input_features, H, W), jnp.float32)
    params = init_params(k_p, num_input_features, growth_rate, bn_size)

    ref = _reference_forward(x, params)

    # f32 matmul path: bit-tight check of the kernel math.
    fwd_f32 = jax.jit(functools.partial(dense_layer_forward, drop_rate=0.0,
                                        matmul_dtype=jnp.float32))
    out_f32 = jax.block_until_ready(fwd_f32(x, params))
    assert out_f32.shape == (N, growth_rate, H, W), out_f32.shape
    np.testing.assert_allclose(np.asarray(out_f32), np.asarray(ref),
                               rtol=1e-4, atol=1e-4)

    # Default (bf16 MXU operands, f32 accumulate / elementwise): looser check.
    fwd = jax.jit(functools.partial(dense_layer_forward, drop_rate=0.0))
    out_bf16 = jax.block_until_ready(fwd(x, params))
    assert out_bf16.shape == (N, growth_rate, H, W), out_bf16.shape
    np.testing.assert_allclose(np.asarray(out_bf16, dtype=np.float32),
                               np.asarray(ref), rtol=2e-2, atol=2e-2)

    print("KERNEL_OK")
</pallas_src>

<mosaic_0001>
module attributes {stable_mosaic.version = 11 : i64} {
  func.func @_dense_layer_kernel(%arg0: i32, %arg1: memref<2x4x256xf32, #tpu.memory_space<vmem>>, %arg2: memref<4x1xf32, #tpu.memory_space<vmem>>, %arg3: memref<4x1xf32, #tpu.memory_space<vmem>>, %arg4: memref<16x4xf32, #tpu.memory_space<vmem>>, %arg5: memref<16x1xf32, #tpu.memory_space<vmem>>, %arg6: memref<72x16xf32, #tpu.memory_space<vmem>>, %arg7: memref<72x256xf32, #tpu.memory_space<vmem>>, %arg8: memref<2x8x256xf32, #tpu.memory_space<vmem>>) attributes {dimension_semantics = [#tpu.dimension_semantics<parallel>], iteration_bounds = array<i64: 1>, scalar_prefetch = 0 : i64, scratch_operands = 0 : i64, tpu.core_type = #tpu.core_type<tc>, window_params = [{transform_indices = @transform_0, window_bounds = array<i64: 2, 4, 256>}, {pipeline_mode = #tpu.pipeline_mode<synchronous>, transform_indices = @transform_1, window_bounds = array<i64: 4, 1>}, {pipeline_mode = #tpu.pipeline_mode<synchronous>, transform_indices = @transform_2, window_bounds = array<i64: 4, 1>}, {pipeline_mode = #tpu.pipeline_mode<synchronous>, transform_indices = @transform_3, window_bounds = array<i64: 16, 4>}, {pipeline_mode = #tpu.pipeline_mode<synchronous>, transform_indices = @transform_4, window_bounds = array<i64: 16, 1>}, {pipeline_mode = #tpu.pipeline_mode<synchronous>, transform_indices = @transform_5, window_bounds = array<i64: 72, 16>}, {pipeline_mode = #tpu.pipeline_mode<synchronous>, transform_indices = @transform_6, window_bounds = array<i64: 72, 256>}, {transform_indices = @transform_7, window_bounds = array<i64: 2, 8, 256>}]} {
    %c0 = arith.constant 0 : index
    %c0_0 = arith.constant 0 : index
    %0 = vector.load %arg2[%c0, %c0_0] : memref<4x1xf32, #tpu.memory_space<vmem>>, vector<4x1xf32>
    %c0_1 = arith.constant 0 : index
    %c0_2 = arith.constant 0 : index
    %1 = vector.load %arg3[%c0_1, %c0_2] : memref<4x1xf32, #tpu.memory_space<vmem>>, vector<4x1xf32>
    %c0_3 = arith.constant 0 : index
    %c0_4 = arith.constant 0 : index
    %2 = vector.load %arg4[%c0_3, %c0_4] : memref<16x4xf32, #tpu.memory_space<vmem>>, vector<16x4xf32>
    %c0_5 = arith.constant 0 : index
    %c0_6 = arith.constant 0 : index
    %3 = vector.load %arg5[%c0_5, %c0_6] : memref<16x1xf32, #tpu.memory_space<vmem>>, vector<16x1xf32>
    %c0_7 = arith.constant 0 : index
    %c0_8 = arith.constant 0 : index
    %4 = vector.load %arg6[%c0_7, %c0_8] : memref<72x16xf32, #tpu.memory_space<vmem>>, vector<72x16xf32>
    %c0_9 = arith.constant 0 : index
    %c0_10 = arith.constant 0 : index
    %5 = vector.load %arg7[%c0_9, %c0_10] : memref<72x256xf32, #tpu.memory_space<vmem>>, vector<72x256xf32>
    %c0_11 = arith.constant 0 : index
    %c0_12 = arith.constant 0 : index
    %c0_13 = arith.constant 0 : index
    %6 = vector.load %arg1[%c0_11, %c0_12, %c0_13] : memref<2x4x256xf32, #tpu.memory_space<vmem>>, vector<1x4x256xf32>
    %7 = vector.shape_cast %6 : vector<1x4x256xf32> to vector<4x256xf32>
    %8 = vector.broadcast %0 : vector<4x1xf32> to vector<4x256xf32>
    %9 = arith.mulf %7, %8 : vector<4x256xf32>
    %10 = vector.broadcast %1 : vector<4x1xf32> to vector<4x256xf32>
    %11 = arith.addf %9, %10 : vector<4x256xf32>
    %cst = arith.constant 0.000000e+00 : f32
    %12 = vector.broadcast %cst : f32 to vector<4x256xf32>
    %13 = arith.maximumf %11, %12 : vector<4x256xf32>
    %cst_14 = arith.constant dense<0.000000e+00> : vector<16x256xf32>
    %14 = tpu.matmul %2, %13, %cst_14 {dimension_numbers = #tpu.dot_dimension_numbers<[1], [0], [0], [1], [0, 0, 1, 1], [], []>} : vector<16x4xf32>, vector<4x256xf32>, vector<16x256xf32> -> vector<16x256xf32>
    %15 = vector.broadcast %3 : vector<16x1xf32> to vector<16x256xf32>
    %16 = arith.addf %14, %15 : vector<16x256xf32>
    %cst_15 = arith.constant 0.000000e+00 : f32
    %17 = vector.broadcast %cst_15 : f32 to vector<16x256xf32>
    %18 = arith.maximumf %16, %17 : vector<16x256xf32>
    %cst_16 = arith.constant dense<0.000000e+00> : vector<72x256xf32>
    %19 = tpu.matmul %4, %18, %cst_16 {dimension_numbers = #tpu.dot_dimension_numbers<[1], [0], [0], [1], [0, 0, 1, 1], [], []>} : vector<72x16xf32>, vector<16x256xf32>, vector<72x256xf32> -> vector<72x256xf32>
    %20 = arith.mulf %19, %5 : vector<72x256xf32>
    %21 = vector.extract_strided_slice %20 {offsets = [32, 0], sizes = [8, 256], strides = [1, 1]} : vector<72x256xf32> to vector<8x256xf32>
    %22 = vector.extract_strided_slice %20 {offsets = [0, 0], sizes = [8, 256], strides = [1, 1]} : vector<72x256xf32> to vector<8x256xf32>
    %c17_i32 = arith.constant 17 : i32
    %23 = tpu.dynamic_rotate %22 by %c17_i32 dim 1 : vector<8x256xf32>, i32 -> vector<8x256xf32>
    %24 = arith.addf %21, %23 : vector<8x256xf32>
    %25 = vector.extract_strided_slice %20 {offsets = [8, 0], sizes = [8, 256], strides = [1, 1]} : vector<72x256xf32> to vector<8x256xf32>
    %c16_i32 = arith.constant 16 : i32
    %26 = tpu.dynamic_rotate %25 by %c16_i32 dim 1 : vector<8x256xf32>, i32 -> vector<8x256xf32>
    %27 = arith.addf %24, %26 : vector<8x256xf32>
    %28 = vector.extract_strided_slice %20 {offsets = [16, 0], sizes = [8, 256], strides = [1, 1]} : vector<72x256xf32> to vector<8x256xf32>
    %c15_i32 = arith.constant 15 : i32
    %29 = tpu.dynamic_rotate %28 by %c15_i32 dim 1 : vector<8x256xf32>, i32 -> vector<8x256xf32>
    %30 = arith.addf %27, %29 : vector<8x256xf32>
    %31 = vector.extract_strided_slice %20 {offsets = [24, 0], sizes = [8, 256], strides = [1, 1]} : vector<72x256xf32> to vector<8x256xf32>
    %c1_i32 = arith.constant 1 : i32
    %32 = tpu.dynamic_rotate %31 by %c1_i32 dim 1 : vector<8x256xf32>, i32 -> vector<8x256xf32>
    %33 = arith.addf %30, %32 : vector<8x256xf32>
    %34 = vector.extract_strided_slice %20 {offsets = [40, 0], sizes = [8, 256], strides = [1, 1]} : vector<72x256xf32> to vector<8x256xf32>
    %c255_i32 = arith.constant 255 : i32
    %35 = tpu.dynamic_rotate %34 by %c255_i32 dim 1 : vector<8x256xf32>, i32 -> vector<8x256xf32>
    %36 = vector.extract_strided_slice %20 {offsets = [48, 0], sizes = [8, 256], strides = [1, 1]} : vector<72x256xf32> to vector<8x256xf32>
    %c241_i32 = arith.constant 241 : i32
    %37 = tpu.dynamic_rotate %36 by %c241_i32 dim 1 : vector<8x256xf32>, i32 -> vector<8x256xf32>
    %38 = arith.addf %35, %37 : vector<8x256xf32>
    %39 = vector.extract_strided_slice %20 {offsets = [56, 0], sizes = [8, 256], strides = [1, 1]} : vector<72x256xf32> to vector<8x256xf32>
    %c240_i32 = arith.constant 240 : i32
    %40 = tpu.dynamic_rotate %39 by %c240_i32 dim 1 : vector<8x256xf32>, i32 -> vector<8x256xf32>
    %41 = arith.addf %38, %40 : vector<8x256xf32>
    %42 = vector.extract_strided_slice %20 {offsets = [64, 0], sizes = [8, 256], strides = [1, 1]} : vector<72x256xf32> to vector<8x256xf32>
    %c239_i32 = arith.constant 239 : i32
    %43 = tpu.dynamic_rotate %42 by %c239_i32 dim 1 : vector<8x256xf32>, i32 -> vector<8x256xf32>
    %44 = arith.addf %41, %43 : vector<8x256xf32>
    %45 = arith.addf %33, %44 : vector<8x256xf32>
    %c0_17 = arith.constant 0 : index
    %c0_18 = arith.constant 0 : index
    %c0_19 = arith.constant 0 : index
    %46 = vector.load %arg8[%c0_17, %c0_18, %c0_19] : memref<2x8x256xf32, #tpu.memory_space<vmem>>, vector<1x8x256xf32>
    %47 = vector.shape_cast %46 : vector<1x8x256xf32> to vector<8x256xf32>
    %48 = vector.shape_cast %45 : vector<8x256xf32> to vector<1x8x256xf32>
    tpu.vector_store %arg8[%c0_17, %c0_18, %c0_19], %48 {strides = array<i32>} : memref<2x8x256xf32, #tpu.memory_space<vmem>>, vector<1x8x256xf32>,
    %c1 = arith.constant 1 : index
    %c0_20 = arith.constant 0 : index
    %c0_21 = arith.constant 0 : index
    %49 = vector.load %arg1[%c1, %c0_20, %c0_21] : memref<2x4x256xf32, #tpu.memory_space<vmem>>, vector<1x4x256xf32>
    %50 = vector.shape_cast %49 : vector<1x4x256xf32> to vector<4x256xf32>
    %51 = vector.broadcast %0 : vector<4x1xf32> to vector<4x256xf32>
    %52 = arith.mulf %50, %51 : vector<4x256xf32>
    %53 = vector.broadcast %1 : vector<4x1xf32> to vector<4x256xf32>
    %54 = arith.addf %52, %53 : vector<4x256xf32>
    %cst_22 = arith.constant 0.000000e+00 : f32
    %55 = vector.broadcast %cst_22 : f32 to vector<4x256xf32>
    %56 = arith.maximumf %54, %55 : vector<4x256xf32>
    %cst_23 = arith.constant dense<0.000000e+00> : vector<16x256xf32>
    %57 = tpu.matmul %2, %56, %cst_23 {dimension_numbers = #tpu.dot_dimension_numbers<[1], [0], [0], [1], [0, 0, 1, 1], [], []>} : vector<16x4xf32>, vector<4x256xf32>, vector<16x256xf32> -> vector<16x256xf32>
    %58 = vector.broadcast %3 : vector<16x1xf32> to vector<16x256xf32>
    %59 = arith.addf %57, %58 : vector<16x256xf32>
    %cst_24 = arith.constant 0.000000e+00 : f32
    %60 = vector.broadcast %cst_24 : f32 to vector<16x256xf32>
    %61 = arith.maximumf %59, %60 : vector<16x256xf32>
    %cst_25 = arith.constant dense<0.000000e+00> : vector<72x256xf32>
    %62 = tpu.matmul %4, %61, %cst_25 {dimension_numbers = #tpu.dot_dimension_numbers<[1], [0], [0], [1], [0, 0, 1, 1], [], []>} : vector<72x16xf32>, vector<16x256xf32>, vector<72x256xf32> -> vector<72x256xf32>
    %63 = arith.mulf %62, %5 : vector<72x256xf32>
    %64 = vector.extract_strided_slice %63 {offsets = [32, 0], sizes = [8, 256], strides = [1, 1]} : vector<72x256xf32> to vector<8x256xf32>
    %65 = vector.extract_strided_slice %63 {offsets = [0, 0], sizes = [8, 256], strides = [1, 1]} : vector<72x256xf32> to vector<8x256xf32>
    %c17_i32_26 = arith.constant 17 : i32
    %66 = tpu.dynamic_rotate %65 by %c17_i32_26 dim 1 : vector<8x256xf32>, i32 -> vector<8x256xf32>
    %67 = arith.addf %64, %66 : vector<8x256xf32>
    %68 = vector.extract_strided_slice %63 {offsets = [8, 0], sizes = [8, 256], strides = [1, 1]} : vector<72x256xf32> to vector<8x256xf32>
    %c16_i32_27 = arith.constant 16 : i32
    %69 = tpu.dynamic_rotate %68 by %c16_i32_27 dim 1 : vector<8x256xf32>, i32 -> vector<8x256xf32>
    %70 = arith.addf %67, %69 : vector<8x256xf32>
    %71 = vector.extract_strided_slice %63 {offsets = [16, 0], sizes = [8, 256], strides = [1, 1]} : vector<72x256xf32> to vector<8x256xf32>
    %c15_i32_28 = arith.constant 15 : i32
    %72 = tpu.dynamic_rotate %71 by %c15_i32_28 dim 1 : vector<8x256xf32>, i32 -> vector<8x256xf32>
    %73 = arith.addf %70, %72 : vector<8x256xf32>
    %74 = vector.extract_strided_slice %63 {offsets = [24, 0], sizes = [8, 256], strides = [1, 1]} : vector<72x256xf32> to vector<8x256xf32>
    %c1_i32_29 = arith.constant 1 : i32
    %75 = tpu.dynamic_rotate %74 by %c1_i32_29 dim 1 : vector<8x256xf32>, i32 -> vector<8x256xf32>
    %76 = arith.addf %73, %75 : vector<8x256xf32>
    %77 = vector.extract_strided_slice %63 {offsets = [40, 0], sizes = [8, 256], strides = [1, 1]} : vector<72x256xf32> to vector<8x256xf32>
    %c255_i32_30 = arith.constant 255 : i32
    %78 = tpu.dynamic_rotate %77 by %c255_i32_30 dim 1 : vector<8x256xf32>, i32 -> vector<8x256xf32>
    %79 = vector.extract_strided_slice %63 {offsets = [48, 0], sizes = [8, 256], strides = [1, 1]} : vector<72x256xf32> to vector<8x256xf32>
    %c241_i32_31 = arith.constant 241 : i32
    %80 = tpu.dynamic_rotate %79 by %c241_i32_31 dim 1 : vector<8x256xf32>, i32 -> vector<8x256xf32>
    %81 = arith.addf %78, %80 : vector<8x256xf32>
    %82 = vector.extract_strided_slice %63 {offsets = [56, 0], sizes = [8, 256], strides = [1, 1]} : vector<72x256xf32> to vector<8x256xf32>
    %c240_i32_32 = arith.constant 240 : i32
    %83 = tpu.dynamic_rotate %82 by %c240_i32_32 dim 1 : vector<8x256xf32>, i32 -> vector<8x256xf32>
    %84 = arith.addf %81, %83 : vector<8x256xf32>
    %85 = vector.extract_strided_slice %63 {offsets = [64, 0], sizes = [8, 256], strides = [1, 1]} : vector<72x256xf32> to vector<8x256xf32>
    %c239_i32_33 = arith.constant 239 : i32
    %86 = tpu.dynamic_rotate %85 by %c239_i32_33 dim 1 : vector<8x256xf32>, i32 -> vector<8x256xf32>
    %87 = arith.addf %84, %86 : vector<8x256xf32>
    %88 = arith.addf %76, %87 : vector<8x256xf32>
    %c1_34 = arith.constant 1 : index
    %c0_35 = arith.constant 0 : index
    %c0_36 = arith.constant 0 : index
    %89 = vector.load %arg8[%c1_34, %c0_35, %c0_36] : memref<2x8x256xf32, #tpu.memory_space<vmem>>, vector<1x8x256xf32>
    %90 = vector.shape_cast %89 : vector<1x8x256xf32> to vector<8x256xf32>
    %91 = vector.shape_cast %88 : vector<8x256xf32> to vector<1x8x256xf32>
    tpu.vector_store %arg8[%c1_34, %c0_35, %c0_36], %91 {strides = array<i32>} : memref<2x8x256xf32, #tpu.memory_space<vmem>>, vector<1x8x256xf32>,
    return
  }
  func.func @transform_0(%arg0: i32) -> (i32, i32, i32) {
    %c0_i32 = arith.constant 0 : i32
    %c0_i32_0 = arith.constant 0 : i32
    %c0_i32_1 = arith.constant 0 : i32
    return %arg0, %c0_i32, %c0_i32_0 : i32, i32, i32
  }
  func.func @transform_1(%arg0: i32) -> (i32, i32) {
    %c0_i32 = arith.constant 0 : i32
    %c0_i32_0 = arith.constant 0 : i32
    %c0_i32_1 = arith.constant 0 : i32
    return %c0_i32, %c0_i32_0 : i32, i32
  }
  func.func @transform_2(%arg0: i32) -> (i32, i32) {
    %c0_i32 = arith.constant 0 : i32
    %c0_i32_0 = arith.constant 0 : i32
    %c0_i32_1 = arith.constant 0 : i32
    return %c0_i32, %c0_i32_0 : i32, i32
  }
  func.func @transform_3(%arg0: i32) -> (i32, i32) {
    %c0_i32 = arith.constant 0 : i32
    %c0_i32_0 = arith.constant 0 : i32
    %c0_i32_1 = arith.constant 0 : i32
    return %c0_i32, %c0_i32_0 : i32, i32
  }
  func.func @transform_4(%arg0: i32) -> (i32, i32) {
    %c0_i32 = arith.constant 0 : i32
    %c0_i32_0 = arith.constant 0 : i32
    %c0_i32_1 = arith.constant 0 : i32
    return %c0_i32, %c0_i32_0 : i32, i32
  }
  func.func @transform_5(%arg0: i32) -> (i32, i32) {
    %c0_i32 = arith.constant 0 : i32
    %c0_i32_0 = arith.constant 0 : i32
    %c0_i32_1 = arith.constant 0 : i32
    return %c0_i32, %c0_i32_0 : i32, i32
  }
  func.func @transform_6(%arg0: i32) -> (i32, i32) {
    %c0_i32 = arith.constant 0 : i32
    %c0_i32_0 = arith.constant 0 : i32
    %c0_i32_1 = arith.constant 0 : i32
    return %c0_i32, %c0_i32_0 : i32, i32
  }
  func.func @transform_7(%arg0: i32) -> (i32, i32, i32) {
    %c0_i32 = arith.constant 0 : i32
    %c0_i32_0 = arith.constant 0 : i32
    %c0_i32_1 = arith.constant 0 : i32
    return %arg0, %c0_i32, %c0_i32_0 : i32, i32, i32
  }
}

</mosaic_0001>

<llo_original>
// kernel: dense_layer_forward.1
$region0: #{dense_layer_forward.1}
  #allocation0 [shape = 'u32[]', space=smem, size = 0x4, offset = 0x4, fixed_abs, tag = 'smem constant byte address 0x4 - core index']
  #allocation1 [shape = 'u32[144,128]{1,0:T(1,128)}', space=vmem, size = 0x12000, scoped, tag = 'internal scratch']
  %s0 = inlined_call_operand.vmem [shape: f32[2,4,256], index: 0, kind: input, shape index: {}]
  %s1 = inlined_call_operand.vmem [shape: f32[4,1], index: 1, kind: input, shape index: {}]
  %s2 = inlined_call_operand.vmem [shape: f32[4,1], index: 2, kind: input, shape index: {}]
  %s3 = inlined_call_operand.vmem [shape: f32[16,4], index: 3, kind: input, shape index: {}]
  %s4 = inlined_call_operand.vmem [shape: f32[16,1], index: 4, kind: input, shape index: {}]
  %s5 = inlined_call_operand.vmem [shape: f32[72,16], index: 5, kind: input, shape index: {}]
  %s6 = inlined_call_operand.vmem [shape: f32[72,256], index: 6, kind: input, shape index: {}]
  %s7 = inlined_call_operand.vmem [shape: f32[2,8,256], index: 7, kind: output, shape index: {}]
  %s8 = sld [smem:[#allocation0]]
  $region38: #{dense_layer_forward.1} parent=0
    _
  %s10 = ssub.s32 1, %s8
  %s11 = scalar_select 0, %s10, %s8
  // Predicated region
  $region2: #{dense_layer_forward.1} parent=0 // pred_check
    _
  $region3: #{dense_layer_forward.1} parent=0 // pred_check_branch
    %13 = sbr.rel (0) target = $region5
  $region4: #{dense_layer_forward.1} parent=0 // pred_region
    _
  $region5: #{dense_layer_forward.1} parent=0 // pred_fallthru
    _
  // Predicated region
  $region6: #{dense_layer_forward.1} parent=0 // pred_check
    _
  $region7: #{dense_layer_forward.1} parent=0 // pred_check_branch
    %15 = sbr.rel (0) target = $region9
  $region8: #{dense_layer_forward.1} parent=0 // pred_region
    _
  $region9: #{dense_layer_forward.1} parent=0 // pred_fallthru
    _
  // Predicated region
  $region10: #{dense_layer_forward.1} parent=0 // pred_check
    _
  $region11: #{dense_layer_forward.1} parent=0 // pred_check_branch
    %17 = sbr.rel (0) target = $region13
  $region12: #{dense_layer_forward.1} parent=0 // pred_region
    _
  $region13: #{dense_layer_forward.1} parent=0 // pred_fallthru
    _
  // Predicated region
  $region14: #{dense_layer_forward.1} parent=0 // pred_check
    _
  $region15: #{dense_layer_forward.1} parent=0 // pred_check_branch
    %19 = sbr.rel (0) target = $region17
  $region16: #{dense_layer_forward.1} parent=0 // pred_region
    _
  $region17: #{dense_layer_forward.1} parent=0 // pred_fallthru
    _
  // Predicated region
  $region18: #{dense_layer_forward.1} parent=0 // pred_check
    _
  $region19: #{dense_layer_forward.1} parent=0 // pred_check_branch
    %21 = sbr.rel (0) target = $region21
  $region20: #{dense_layer_forward.1} parent=0 // pred_region
    _
  $region21: #{dense_layer_forward.1} parent=0 // pred_fallthru
    _
  // Predicated region
  $region22: #{dense_layer_forward.1} parent=0 // pred_check
    _
  $region23: #{dense_layer_forward.1} parent=0 // pred_check_branch
    %23 = sbr.rel (0) target = $region25
  $region24: #{dense_layer_forward.1} parent=0 // pred_region
    _
  $region25: #{dense_layer_forward.1} parent=0 // pred_fallthru
    _
  // Predicated region
  $region26: #{dense_layer_forward.1} parent=0 // pred_check
    _
  $region27: #{dense_layer_forward.1} parent=0 // pred_check_branch
    %25 = sbr.rel (0) target = $region29
  $region28: #{dense_layer_forward.1} parent=0 // pred_region
    _
  $region29: #{dense_layer_forward.1} parent=0 // pred_fallthru
    _
  %v26 = vld [vmem:[%s1] sm:$0xf]
  %v27 = vld [vmem:[%s2] sm:$0xf]
  %v28 = vld [vmem:[%s3] sm:$0xff]
  %v29 = vld [vmem:[%s3 + $0x8] sm:$0xff]
  %v30 = vld [vmem:[%s4] sm:$0xff]
  %v31 = vld [vmem:[%s4 + $0x8] sm:$0xff]
  %v32 = vld [vmem:[%s5] sm:$0xff]
  %v33 = vld [vmem:[%s5 + $0x8] sm:$0xff]
  %v34 = vld [vmem:[%s5 + $0x10] sm:$0xff]
  %v35 = vld [vmem:[%s5 + $0x18] sm:$0xff]
  %v36 = vld [vmem:[%s5 + $0x20] sm:$0xff]
  %v37 = vld [vmem:[%s5 + $0x28] sm:$0xff]
  %v38 = vld [vmem:[%s5 + $0x30] sm:$0xff]
  %v39 = vld [vmem:[%s5 + $0x38] sm:$0xff]
  %v40 = vld [vmem:[%s5 + $0x40] sm:$0xff]
  %v41 = vld [vmem:[%s6] sm:$0xff]
  %v42 = vld [vmem:[%s6 + $0x8] sm:$0xff]
  %v43 = vld [vmem:[%s6 + $0x10] sm:$0xff]
  %v44 = vld [vmem:[%s6 + $0x18] sm:$0xff]
  %v45 = vld [vmem:[%s6 + $0x20] sm:$0xff]
  %v46 = vld [vmem:[%s6 + $0x28] sm:$0xff]
  %v47 = vld [vmem:[%s6 + $0x30] sm:$0xff]
  %v48 = vld [vmem:[%s6 + $0x38] sm:$0xff]
  %v49 = vld [vmem:[%s6 + $0x40] sm:$0xff]
  %v50 = vld [vmem:[%s6 + $0x48] sm:$0xff]
  %v51 = vld [vmem:[%s6 + $0x50] sm:$0xff]
  %v52 = vld [vmem:[%s6 + $0x58] sm:$0xff]
  %v53 = vld [vmem:[%s6 + $0x60] sm:$0xff]
  %v54 = vld [vmem:[%s6 + $0x68] sm:$0xff]
  %v55 = vld [vmem:[%s6 + $0x70] sm:$0xff]
  %v56 = vld [vmem:[%s6 + $0x78] sm:$0xff]
  %v57 = vld [vmem:[%s6 + $0x80] sm:$0xff]
  %v58 = vld [vmem:[%s6 + $0x88] sm:$0xff]
  %v59 = vld [vmem:[%s0] sm:$0xff]
  %61 = vset.pattern.permute.xlu0 0
  %62 = vperm.xlu0 %61, %v26
  %v63 = vpop.permute.xlu0 %62
  %v65 = vunpack.c.l.s4 839922192
  %v66 = vunpack.c.0.s8 %v65
  %v67 = vlaneseq
  %v68 = vshrl.u32 %v67, 7
  %v69 = vsub.s32 %v66, %v68
  %v70 = vrot.slane %v63, %v69
  %v72 = vmul.f32 %v59, %v70
  %74 = vset.pattern.permute.xlu0 0
  %75 = vperm.xlu0 %74, %v27
  %v76 = vpop.permute.xlu0 %75
  %v78 = vunpack.c.l.s4 839922192
  %v79 = vunpack.c.0.s8 %v78
  %v80 = vlaneseq
  %v81 = vshrl.u32 %v80, 7
  %v82 = vsub.s32 %v79, %v81
  %v83 = vrot.slane %v76, %v82
  %v85 = vadd.f32 %v72, %v83
  %v86 = vmax.f32 %v85, 0.0
  %88 = vset.pattern.permute.xlu0 0
  %89 = vperm.xlu0 %88, %v30
  %v90 = vpop.permute.xlu0 %89
  %93 = vset.pattern.permute.xlu0 0
  %94 = vperm.xlu0 %93, %v31
  %v95 = vpop.permute.xlu0 %94
  %v98 = vcombine.high %v86, %v86
  %vm99 = vcmask 31744
  %v101 = vsel %vm99, %v28, 0
  %v104 = vsel %vm99, %v29, 0
  %vm106 = vcmask 1043456
  %v107 = vsel %vm106, %v86, 0
  %v109 = vsel %vm106, %v98, 0
  %111 = vmatprep.subr.mxu0 %v109
  %112 = vmatpush1.msra.mxu0 %v107
  %113 = vmatprep.subr.mxu0 0.0
  %114 = vmatpush1.msra.mxu0 0.0
  %115 = vmatprep.subr.mxu0 0.0
  %116 = vmatpush1.msra.mxu0 0.0
  %117 = vmatprep.subr.mxu0 0.0
  %118 = vmatpush1.msra.mxu0 0.0
  %119 = vmatprep.subr.mxu0 0.0
  %120 = vmatpush1.msra.mxu0 0.0
  %121 = vmatprep.subr.mxu0 0.0
  %122 = vmatpush1.msra.mxu0 0.0
  %123 = vmatprep.subr.mxu0 0.0
  %124 = vmatpush1.msra.mxu0 0.0
  %125 = vmatprep.subr.mxu0 0.0
  %126 = vmatpush1.msra.mxu0 0.0
  %127 = vmatprep.subr.mxu0 0.0
  %128 = vmatpush1.msra.mxu0 0.0
  %129 = vmatprep.subr.mxu0 0.0
  %130 = vmatpush1.msra.mxu0 0.0
  %131 = vmatprep.subr.mxu0 0.0
  %132 = vmatpush1.msra.mxu0 0.0
  %133 = vmatprep.subr.mxu0 0.0
  %134 = vmatpush1.msra.mxu0 0.0
  %135 = vmatprep.subr.mxu0 0.0
  %136 = vmatpush1.msra.mxu0 0.0
  %137 = vmatprep.subr.mxu0 0.0
  %138 = vmatpush1.msra.mxu0 0.0
  %139 = vmatprep.subr.mxu0 0.0
  %140 = vmatpush1.msra.mxu0 0.0
  %141 = vmatprep.subr.mxu0 0.0
  %142 = vmatpush1.msra.mxu0 0.0
  %143 = vmatprep.subr.mxu0 0.0
  %144 = vmatpush1.msra.mxu0 0.0
  %145 = vmatprep.subr.mxu0 0.0
  %146 = vmatpush1.msra.mxu0 0.0
  %147 = vmatprep.subr.mxu0 0.0
  %148 = vmatpush1.msra.mxu0 0.0
  %149 = vmatprep.subr.mxu0 0.0
  %150 = vmatpush1.msra.mxu0 0.0
  %151 = vmatprep.subr.mxu0 0.0
  %152 = vmatpush1.msra.mxu0 0.0
  %153 = vmatprep.subr.mxu0 0.0
  %154 = vmatpush1.msra.mxu0 0.0
  %155 = vmatprep.subr.mxu0 0.0
  %156 = vmatpush1.msra.mxu0 0.0
  %157 = vmatprep.subr.mxu0 0.0
  %158 = vmatpush1.msra.mxu0 0.0
  %159 = vmatprep.subr.mxu0 0.0
  %160 = vmatpush1.msra.mxu0 0.0
  %161 = vmatprep.subr.mxu0 0.0
  %162 = vmatpush1.msra.mxu0 0.0
  %163 = vmatprep.subr.mxu0 0.0
  %164 = vmatpush1.msra.mxu0 0.0
  %165 = vmatprep.subr.mxu0 0.0
  %166 = vmatpush1.msra.mxu0 0.0
  %167 = vmatprep.subr.mxu0 0.0
  %168 = vmatpush1.msra.mxu0 0.0
  %169 = vmatprep.subr.mxu0 0.0
  %170 = vmatpush1.msra.mxu0 0.0
  %171 = vmatprep.subr.mxu0 0.0
  %172 = vmatpush1.msra.mxu0 0.0
  %173 = vmatprep.subr.mxu0 0.0
  %174 = vmatpush1.msra.mxu0 0.0
  %175 = vmatprep.mubr.f32.mxu0 0.0
  %176 = vmatmul.mubr.f32.gmra.mrb[0].mxu0 %v101
  %v177 = vpop.f32.mrb[0].mxu0
  %v178 = vadd.f32 %v90, %v177
  %v179 = vpop.f32.mrb[0].mxu0
  %v180 = vadd.f32 %v90, %v179
  %181 = vmatprep.mubr.f32.mxu0 0.0
  %182 = vmatmul.mubr.f32.gmra.mrb[0].mxu0 %v104
  %v183 = vpop.f32.mrb[0].mxu0
  %v184 = vadd.f32 %v95, %v183
  %v185 = vpop.f32.mrb[0].mxu0
  %v186 = vadd.f32 %v95, %v185
  %187 = vdwg.mxu0
  %v188 = vmax.f32 %v178, 0.0
  %v189 = vmax.f32 %v180, 0.0
  %v190 = vmax.f32 %v184, 0.0
  %v191 = vmax.f32 %v186, 0.0
  %vm192 = vcmask 130048
  %v194 = vsel %vm192, %v32, 0
  %v197 = vsel %vm192, %v33, 0
  %v200 = vsel %vm192, %v34, 0
  %v203 = vsel %vm192, %v35, 0
  %v206 = vsel %vm192, %v36, 0
  %v209 = vsel %vm192, %v37, 0
  %v212 = vsel %vm192, %v38, 0
  %v215 = vsel %vm192, %v39, 0
  %v218 = vsel %vm192, %v40, 0
  %220 = vmatprep.subr.mxu0 %v189
  %221 = vmatpush1.msra.mxu0 %v188
  %222 = vmatprep.subr.mxu0 %v191
  %223 = vmatpush1.msra.mxu0 %v190
  %224 = vmatprep.subr.mxu0 0.0
  %225 = vmatpush1.msra.mxu0 0.0
  %226 = vmatprep.subr.mxu0 0.0
  %227 = vmatpush1.msra.mxu0 0.0
  %228 = vmatprep.subr.mxu0 0.0
  %229 = vmatpush1.msra.mxu0 0.0
  %230 = vmatprep.subr.mxu0 0.0
  %231 = vmatpush1.msra.mxu0 0.0
  %232 = vmatprep.subr.mxu0 0.0
  %233 = vmatpush1.msra.mxu0 0.0
  %234 = vmatprep.subr.mxu0 0.0
  %235 = vmatpush1.msra.mxu0 0.0
  %236 = vmatprep.subr.mxu0 0.0
  %237 = vmatpush1.msra.mxu0 0.0
  %238 = vmatprep.subr.mxu0 0.0
  %239 = vmatpush1.msra.mxu0 0.0
  %240 = vmatprep.subr.mxu0 0.0
  %241 = vmatpush1.msra.mxu0 0.0
  %242 = vmatprep.subr.mxu0 0.0
  %243 = vmatpush1.msra.mxu0 0.0
  %244 = vmatprep.subr.mxu0 0.0
  %245 = vmatpush1.msra.mxu0 0.0
  %246 = vmatprep.subr.mxu0 0.0
  %247 = vmatpush1.msra.mxu0 0.0
  %248 = vmatprep.subr.mxu0 0.0
  %249 = vmatpush1.msra.mxu0 0.0
  %250 = vmatprep.subr.mxu0 0.0
  %251 = vmatpush1.msra.mxu0 0.0
  %252 = vmatprep.subr.mxu0 0.0
  %253 = vmatpush1.msra.mxu0 0.0
  %254 = vmatprep.subr.mxu0 0.0
  %255 = vmatpush1.msra.mxu0 0.0
  %256 = vmatprep.subr.mxu0 0.0
  %257 = vmatpush1.msra.mxu0 0.0
  %258 = vmatprep.subr.mxu0 0.0
  %259 = vmatpush1.msra.mxu0 0.0
  %260 = vmatprep.subr.mxu0 0.0
  %261 = vmatpush1.msra.mxu0 0.0
  %262 = vmatprep.subr.mxu0 0.0
  %263 = vmatpush1.msra.mxu0 0.0
  %264 = vmatprep.subr.mxu0 0.0
  %265 = vmatpush1.msra.mxu0 0.0
  %266 = vmatprep.subr.mxu0 0.0
  %267 = vmatpush1.msra.mxu0 0.0
  %268 = vmatprep.subr.mxu0 0.0
  %269 = vmatpush1.msra.mxu0 0.0
  %270 = vmatprep.subr.mxu0 0.0
  %271 = vmatpush1.msra.mxu0 0.0
  %272 = vmatprep.subr.mxu0 0.0
  %273 = vmatpush1.msra.mxu0 0.0
  %274 = vmatprep.subr.mxu0 0.0
  %275 = vmatpush1.msra.mxu0 0.0
  %276 = vmatprep.subr.mxu0 0.0
  %277 = vmatpush1.msra.mxu0 0.0
  %278 = vmatprep.subr.mxu0 0.0
  %279 = vmatpush1.msra.mxu0 0.0
  %280 = vmatprep.subr.mxu0 0.0
  %281 = vmatpush1.msra.mxu0 0.0
  %282 = vmatprep.subr.mxu0 0.0
  %283 = vmatpush1.msra.mxu0 0.0
  %284 = vmatprep.mubr.f32.mxu0 0.0
  %285 = vmatmul.mubr.f32.gmra.mrb[0].mxu0 %v194
  %v286 = vpop.f32.mrb[0].mxu0
  %v287 = vadd.f32 0.0, %v286
  %v288 = vpop.f32.mrb[0].mxu0
  %v289 = vadd.f32 0.0, %v288
  %290 = vmatprep.mubr.f32.mxu0 0.0
  %291 = vmatmul.mubr.f32.gmra.mrb[0].mxu0 %v197
  %v292 = vpop.f32.mrb[0].mxu0
  %v293 = vadd.f32 0.0, %v292
  %v294 = vpop.f32.mrb[0].mxu0
  %v295 = vadd.f32 0.0, %v294
  %296 = vmatprep.mubr.f32.mxu0 0.0
  %297 = vmatmul.mubr.f32.gmra.mrb[0].mxu0 %v200
  %v298 = vpop.f32.mrb[0].mxu0
  %v299 = vadd.f32 0.0, %v298
  %v300 = vpop.f32.mrb[0].mxu0
  %v301 = vadd.f32 0.0, %v300
  %302 = vmatprep.mubr.f32.mxu0 0.0
  %303 = vmatmul.mubr.f32.gmra.mrb[0].mxu0 %v203
  %v304 = vpop.f32.mrb[0].mxu0
  %v305 = vadd.f32 0.0, %v304
  %v306 = vpop.f32.mrb[0].mxu0
  %v307 = vadd.f32 0.0, %v306
  %308 = vmatprep.mubr.f32.mxu0 0.0
  %309 = vmatmul.mubr.f32.gmra.mrb[0].mxu0 %v206
  %v310 = vpop.f32.mrb[0].mxu0
  %v311 = vadd.f32 0.0, %v310
  %v312 = vpop.f32.mrb[0].mxu0
  %v313 = vadd.f32 0.0, %v312
  %314 = vmatprep.mubr.f32.mxu0 0.0
  %315 = vmatmul.mubr.f32.gmra.mrb[0].mxu0 %v209
  %v316 = vpop.f32.mrb[0].mxu0
  %v317 = vadd.f32 0.0, %v316
  %v318 = vpop.f32.mrb[0].mxu0
  %v319 = vadd.f32 0.0, %v318
  %320 = vmatprep.mubr.f32.mxu0 0.0
  %321 = vmatmul.mubr.f32.gmra.mrb[0].mxu0 %v212
  %v322 = vpop.f32.mrb[0].mxu0
  %v323 = vadd.f32 0.0, %v322
  %v324 = vpop.f32.mrb[0].mxu0
  %v325 = vadd.f32 0.0, %v324
  %326 = vmatprep.mubr.f32.mxu0 0.0
  %327 = vmatmul.mubr.f32.gmra.mrb[0].mxu0 %v215
  %v328 = vpop.f32.mrb[0].mxu0
  %v329 = vadd.f32 0.0, %v328
  %v330 = vpop.f32.mrb[0].mxu0
  %v331 = vadd.f32 0.0, %v330
  %332 = vmatprep.mubr.f32.mxu0 0.0
  %333 = vmatmul.mubr.f32.gmra.mrb[0].mxu0 %v218
  %v334 = vpop.f32.mrb[0].mxu0
  %v335 = vadd.f32 0.0, %v334
  %v336 = vpop.f32.mrb[0].mxu0
  %v337 = vadd.f32 0.0, %v336
  %338 = vdwg.mxu0
  %v339 = vmul.f32 %v287, %v41
  %v340 = vmul.f32 %v289, %v42
  %v341 = vmul.f32 %v293, %v43
  %v342 = vmul.f32 %v295, %v44
  %v343 = vmul.f32 %v299, %v45
  %v344 = vmul.f32 %v301, %v46
  %v345 = vmul.f32 %v305, %v47
  %v346 = vmul.f32 %v307, %v48
  %v347 = vmul.f32 %v311, %v49
  %v348 = vmul.f32 %v313, %v50
  %v349 = vmul.f32 %v317, %v51
  %v350 = vmul.f32 %v319, %v52
  %v351 = vmul.f32 %v323, %v53
  %v352 = vmul.f32 %v325, %v54
  %v353 = vmul.f32 %v329, %v55
  %v354 = vmul.f32 %v331, %v56
  %v355 = vmul.f32 %v335, %v57
  %v356 = vmul.f32 %v337, %v58
  %357 = vrot.lane.b32.xlu0 %v339, 17
  %v358 = vpop.permute.xlu0 %357
  %359 = vrot.lane.b32.xlu0 %v340, 17
  %v360 = vpop.permute.xlu0 %359
  %v361 = vlaneseq
  %v362 = vand.u32 %v361, 127
  %vm363 = vcmp.lt.s32.totalorder %v362, 17
  %v364 = vsel %vm363, %v358, %v360
  %v365 = vsel %vm363, %v360, %v358
  %v366 = vadd.f32 %v347, %v365
  %v367 = vadd.f32 %v348, %v364
  %368 = vrot.lane.b32.xlu0 %v341, 16
  %v369 = vpop.permute.xlu0 %368
  %370 = vrot.lane.b32.xlu0 %v342, 16
  %v371 = vpop.permute.xlu0 %370
  %vm372 = vcmp.lt.s32.totalorder %v362, 16
  %v373 = vsel %vm372, %v369, %v371
  %v374 = vsel %vm372, %v371, %v369
  %v375 = vadd.f32 %v366, %v374
  %v376 = vadd.f32 %v367, %v373
  %377 = vrot.lane.b32.xlu0 %v343, 15
  %v378 = vpop.permute.xlu0 %377
  %379 = vrot.lane.b32.xlu0 %v344, 15
  %v380 = vpop.permute.xlu0 %379
  %vm381 = vcmp.lt.s32.totalorder %v362, 15
  %v382 = vsel %vm381, %v378, %v380
  %v383 = vsel %vm381, %v380, %v378
  %v384 = vadd.f32 %v375, %v383
  %v385 = vadd.f32 %v376, %v382
  %386 = vrot.lane.b32.xlu0 %v345, 1
  %v387 = vpop.permute.xlu0 %386
  %388 = vrot.lane.b32.xlu0 %v346, 1
  %v389 = vpop.permute.xlu0 %388
  %vm390 = vcmp.lt.s32.totalorder %v362, 1
  %v391 = vsel %vm390, %v387, %v389
  %v392 = vsel %vm390, %v389, %v387
  %v393 = vadd.f32 %v384, %v392
  %v394 = vadd.f32 %v385, %v391
  %395 = vrot.lane.b32.xlu0 %v349, 127
  %v396 = vpop.permute.xlu0 %395
  %397 = vrot.lane.b32.xlu0 %v350, 127
  %v398 = vpop.permute.xlu0 %397
  %vm399 = vcmp.lt.s32.totalorder %v362, 127
  %v400 = vsel %vm399, %v396, %v398
  %v401 = vsel %vm399, %v398, %v396
  %402 = vrot.lane.b32.xlu0 %v351, 113
  %v403 = vpop.permute.xlu0 %402
  %404 = vrot.lane.b32.xlu0 %v352, 113
  %v405 = vpop.permute.xlu0 %404
  %vm406 = vcmp.lt.s32.totalorder %v362, 113
  %v407 = vsel %vm406, %v403, %v405
  %v408 = vsel %vm406, %v405, %v403
  %v409 = vadd.f32 %v400, %v407
  %v410 = vadd.f32 %v401, %v408
  %411 = vrot.lane.b32.xlu0 %v353, 112
  %v412 = vpop.permute.xlu0 %411
  %413 = vrot.lane.b32.xlu0 %v354, 112
  %v414 = vpop.permute.xlu0 %413
  %vm415 = vcmp.lt.s32.totalorder %v362, 112
  %v416 = vsel %vm415, %v412, %v414
  %v417 = vsel %vm415, %v414, %v412
  %v418 = vadd.f32 %v409, %v416
  %v419 = vadd.f32 %v410, %v417
  %420 = vrot.lane.b32.xlu0 %v355, 111
  %v421 = vpop.permute.xlu0 %420
  %422 = vrot.lane.b32.xlu0 %v356, 111
  %v423 = vpop.permute.xlu0 %422
  %vm424 = vcmp.lt.s32.totalorder %v362, 111
  %v425 = vsel %vm424, %v421, %v423
  %v426 = vsel %vm424, %v423, %v421
  %v427 = vadd.f32 %v418, %v425
  %v428 = vadd.f32 %v419, %v426
  %v429 = vadd.f32 %v393, %v427
  %v430 = vadd.f32 %v394, %v428
  %431 = vst [vmem:[%s7] sm:$0xff] %v429
  %432 = vst [vmem:[%s7 + $0x8] sm:$0xff] %v430
  %s433 = scalar_lea.vmem %s0, 8
  %v434 = vld [vmem:[%s433] sm:$0xff]
  %v435 = vmul.f32 %v434, %v70
  %v436 = vadd.f32 %v435, %v83
  %v437 = vmax.f32 %v436, 0.0
  %v439 = vcombine.high %v437, %v437
  %v440 = vsel %vm106, %v437, 0
  %v442 = vsel %vm106, %v439, 0
  %444 = vmatprep.subr.mxu0 %v442
  %445 = vmatpush1.msra.mxu0 %v440
  %446 = vmatprep.subr.mxu0 0.0
  %447 = vmatpush1.msra.mxu0 0.0
  %448 = vmatprep.subr.mxu0 0.0
  %449 = vmatpush1.msra.mxu0 0.0
  %450 = vmatprep.subr.mxu0 0.0
  %451 = vmatpush1.msra.mxu0 0.0
  %452 = vmatprep.subr.mxu0 0.0
  %453 = vmatpush1.msra.mxu0 0.0
  %454 = vmatprep.subr.mxu0 0.0
  %455 = vmatpush1.msra.mxu0 0.0
  %456 = vmatprep.subr.mxu0 0.0
  %457 = vmatpush1.msra.mxu0 0.0
  %458 = vmatprep.subr.mxu0 0.0
  %459 = vmatpush1.msra.mxu0 0.0
  %460 = vmatprep.subr.mxu0 0.0
  %461 = vmatpush1.msra.mxu0 0.0
  %462 = vmatprep.subr.mxu0 0.0
  %463 = vmatpush1.msra.mxu0 0.0
  %464 = vmatprep.subr.mxu0 0.0
  %465 = vmatpush1.msra.mxu0 0.0
  %466 = vmatprep.subr.mxu0 0.0
  %467 = vmatpush1.msra.mxu0 0.0
  %468 = vmatprep.subr.mxu0 0.0
  %469 = vmatpush1.msra.mxu0 0.0
  %470 = vmatprep.subr.mxu0 0.0
  %471 = vmatpush1.msra.mxu0 0.0
  %472 = vmatprep.subr.mxu0 0.0
  %473 = vmatpush1.msra.mxu0 0.0
  %474 = vmatprep.subr.mxu0 0.0
  %475 = vmatpush1.msra.mxu0 0.0
  %476 = vmatprep.subr.mxu0 0.0
  %477 = vmatpush1.msra.mxu0 0.0
  %478 = vmatprep.subr.mxu0 0.0
  %479 = vmatpush1.msra.mxu0 0.0
  %480 = vmatprep.subr.mxu0 0.0
  %481 = vmatpush1.msra.mxu0 0.0
  %482 = vmatprep.subr.mxu0 0.0
  %483 = vmatpush1.msra.mxu0 0.0
  %484 = vmatprep.subr.mxu0 0.0
  %485 = vmatpush1.msra.mxu0 0.0
  %486 = vmatprep.subr.mxu0 0.0
  %487 = vmatpush1.msra.mxu0 0.0
  %488 = vmatprep.subr.mxu0 0.0
  %489 = vmatpush1.msra.mxu0 0.0
  %490 = vmatprep.subr.mxu0 0.0
  %491 = vmatpush1.msra.mxu0 0.0
  %492 = vmatprep.subr.mxu0 0.0
  %493 = vmatpush1.msra.mxu0 0.0
  %494 = vmatprep.subr.mxu0 0.0
  %495 = vmatpush1.msra.mxu0 0.0
  %496 = vmatprep.subr.mxu0 0.0
  %497 = vmatpush1.msra.mxu0 0.0
  %498 = vmatprep.subr.mxu0 0.0
  %499 = vmatpush1.msra.mxu0 0.0
  %500 = vmatprep.subr.mxu0 0.0
  %501 = vmatpush1.msra.mxu0 0.0
  %502 = vmatprep.subr.mxu0 0.0
  %503 = vmatpush1.msra.mxu0 0.0
  %504 = vmatprep.subr.mxu0 0.0
  %505 = vmatpush1.msra.mxu0 0.0
  %506 = vmatprep.subr.mxu0 0.0
  %507 = vmatpush1.msra.mxu0 0.0
  %508 = vmatprep.mubr.f32.mxu0 0.0
  %509 = vmatmul.mubr.f32.gmra.mrb[0].mxu0 %v101
  %v510 = vpop.f32.mrb[0].mxu0
  %v511 = vadd.f32 %v90, %v510
  %v512 = vpop.f32.mrb[0].mxu0
  %v513 = vadd.f32 %v90, %v512
  %514 = vmatprep.mubr.f32.mxu0 0.0
  %515 = vmatmul.mubr.f32.gmra.mrb[0].mxu0 %v104
  %v516 = vpop.f32.mrb[0].mxu0
  %v517 = vadd.f32 %v95, %v516
  %v518 = vpop.f32.mrb[0].mxu0
  %v519 = vadd.f32 %v95, %v518
  %520 = vdwg.mxu0
  %v521 = vmax.f32 %v511, 0.0
  %v522 = vmax.f32 %v513, 0.0
  %v523 = vmax.f32 %v517, 0.0
  %v524 = vmax.f32 %v519, 0.0
  %525 = vmatprep.subr.mxu0 %v522
  %526 = vmatpush1.msra.mxu0 %v521
  %527 = vmatprep.subr.mxu0 %v524
  %528 = vmatpush1.msra.mxu0 %v523
  %529 = vmatprep.subr.mxu0 0.0
  %530 = vmatpush1.msra.mxu0 0.0
  %531 = vmatprep.subr.mxu0 0.0
  %532 = vmatpush1.msra.mxu0 0.0
  %533 = vmatprep.subr.mxu0 0.0
  %534 = vmatpush1.msra.mxu0 0.0
  %535 = vmatprep.subr.mxu0 0.0
  %536 = vmatpush1.msra.mxu0 0.0
  %537 = vmatprep.subr.mxu0 0.0
  %538 = vmatpush1.msra.mxu0 0.0
  %539 = vmatprep.subr.mxu0 0.0
  %540 = vmatpush1.msra.mxu0 0.0
  %541 = vmatprep.subr.mxu0 0.0
  %542 = vmatpush1.msra.mxu0 0.0
  %543 = vmatprep.subr.mxu0 0.0
  %544 = vmatpush1.msra.mxu0 0.0
  %545 = vmatprep.subr.mxu0 0.0
  %546 = vmatpush1.msra.mxu0 0.0
  %547 = vmatprep.subr.mxu0 0.0
  %548 = vmatpush1.msra.mxu0 0.0
  %549 = vmatprep.subr.mxu0 0.0
  %550 = vmatpush1.msra.mxu0 0.0
  %551 = vmatprep.subr.mxu0 0.0
  %552 = vmatpush1.msra.mxu0 0.0
  %553 = vmatprep.subr.mxu0 0.0
  %554 = vmatpush1.msra.mxu0 0.0
  %555 = vmatprep.subr.mxu0 0.0
  %556 = vmatpush1.msra.mxu0 0.0
  %557 = vmatprep.subr.mxu0 0.0
  %558 = vmatpush1.msra.mxu0 0.0
  %559 = vmatprep.subr.mxu0 0.0
  %560 = vmatpush1.msra.mxu0 0.0
  %561 = vmatprep.subr.mxu0 0.0
  %562 = vmatpush1.msra.mxu0 0.0
  %563 = vmatprep.subr.mxu0 0.0
  %564 = vmatpush1.msra.mxu0 0.0
  %565 = vmatprep.subr.mxu0 0.0
  %566 = vmatpush1.msra.mxu0 0.0
  %567 = vmatprep.subr.mxu0 0.0
  %568 = vmatpush1.msra.mxu0 0.0
  %569 = vmatprep.subr.mxu0 0.0
  %570 = vmatpush1.msra.mxu0 0.0
  %571 = vmatprep.subr.mxu0 0.0
  %572 = vmatpush1.msra.mxu0 0.0
  %573 = vmatprep.subr.mxu0 0.0
  %574 = vmatpush1.msra.mxu0 0.0
  %575 = vmatprep.subr.mxu0 0.0
  %576 = vmatpush1.msra.mxu0 0.0
  %577 = vmatprep.subr.mxu0 0.0
  %578 = vmatpush1.msra.mxu0 0.0
  %579 = vmatprep.subr.mxu0 0.0
  %580 = vmatpush1.msra.mxu0 0.0
  %581 = vmatprep.subr.mxu0 0.0
  %582 = vmatpush1.msra.mxu0 0.0
  %583 = vmatprep.subr.mxu0 0.0
  %584 = vmatpush1.msra.mxu0 0.0
  %585 = vmatprep.subr.mxu0 0.0
  %586 = vmatpush1.msra.mxu0 0.0
  %587 = vmatprep.subr.mxu0 0.0
  %588 = vmatpush1.msra.mxu0 0.0
  %589 = vmatprep.mubr.f32.mxu0 0.0
  %590 = vmatmul.mubr.f32.gmra.mrb[0].mxu0 %v194
  %v591 = vpop.f32.mrb[0].mxu0
  %v592 = vadd.f32 0.0, %v591
  %v593 = vpop.f32.mrb[0].mxu0
  %v594 = vadd.f32 0.0, %v593
  %595 = vmatprep.mubr.f32.mxu0 0.0
  %596 = vmatmul.mubr.f32.gmra.mrb[0].mxu0 %v197
  %v597 = vpop.f32.mrb[0].mxu0
  %v598 = vadd.f32 0.0, %v597
  %v599 = vpop.f32.mrb[0].mxu0
  %v600 = vadd.f32 0.0, %v599
  %601 = vmatprep.mubr.f32.mxu0 0.0
  %602 = vmatmul.mubr.f32.gmra.mrb[0].mxu0 %v200
  %v603 = vpop.f32.mrb[0].mxu0
  %v604 = vadd.f32 0.0, %v603
  %v605 = vpop.f32.mrb[0].mxu0
  %v606 = vadd.f32 0.0, %v605
  %607 = vmatprep.mubr.f32.mxu0 0.0
  %608 = vmatmul.mubr.f32.gmra.mrb[0].mxu0 %v203
  %v609 = vpop.f32.mrb[0].mxu0
  %v610 = vadd.f32 0.0, %v609
  %v611 = vpop.f32.mrb[0].mxu0
  %v612 = vadd.f32 0.0, %v611
  %613 = vmatprep.mubr.f32.mxu0 0.0
  %614 = vmatmul.mubr.f32.gmra.mrb[0].mxu0 %v206
  %v615 = vpop.f32.mrb[0].mxu0
  %v616 = vadd.f32 0.0, %v615
  %v617 = vpop.f32.mrb[0].mxu0
  %v618 = vadd.f32 0.0, %v617
  %619 = vmatprep.mubr.f32.mxu0 0.0
  %620 = vmatmul.mubr.f32.gmra.mrb[0].mxu0 %v209
  %v621 = vpop.f32.mrb[0].mxu0
  %v622 = vadd.f32 0.0, %v621
  %v623 = vpop.f32.mrb[0].mxu0
  %v624 = vadd.f32 0.0, %v623
  %625 = vmatprep.mubr.f32.mxu0 0.0
  %626 = vmatmul.mubr.f32.gmra.mrb[0].mxu0 %v212
  %v627 = vpop.f32.mrb[0].mxu0
  %v628 = vadd.f32 0.0, %v627
  %v629 = vpop.f32.mrb[0].mxu0
  %v630 = vadd.f32 0.0, %v629
  %631 = vmatprep.mubr.f32.mxu0 0.0
  %632 = vmatmul.mubr.f32.gmra.mrb[0].mxu0 %v215
  %v633 = vpop.f32.mrb[0].mxu0
  %v634 = vadd.f32 0.0, %v633
  %v635 = vpop.f32.mrb[0].mxu0
  %v636 = vadd.f32 0.0, %v635
  %637 = vmatprep.mubr.f32.mxu0 0.0
  %638 = vmatmul.mubr.f32.gmra.mrb[0].mxu0 %v218
  %v639 = vpop.f32.mrb[0].mxu0
  %v640 = vadd.f32 0.0, %v639
  %v641 = vpop.f32.mrb[0].mxu0
  %v642 = vadd.f32 0.0, %v641
  %643 = vdwg.mxu0
  %v644 = vmul.f32 %v592, %v41
  %v645 = vmul.f32 %v594, %v42
  %v646 = vmul.f32 %v598, %v43
  %v647 = vmul.f32 %v600, %v44
  %v648 = vmul.f32 %v604, %v45
  %v649 = vmul.f32 %v606, %v46
  %v650 = vmul.f32 %v610, %v47
  %v651 = vmul.f32 %v612, %v48
  %v652 = vmul.f32 %v616, %v49
  %v653 = vmul.f32 %v618, %v50
  %v654 = vmul.f32 %v622, %v51
  %v655 = vmul.f32 %v624, %v52
  %v656 = vmul.f32 %v628, %v53
  %v657 = vmul.f32 %v630, %v54
  %v658 = vmul.f32 %v634, %v55
  %v659 = vmul.f32 %v636, %v56
  %v660 = vmul.f32 %v640, %v57
  %v661 = vmul.f32 %v642, %v58
  %662 = vrot.lane.b32.xlu0 %v644, 17
  %v663 = vpop.permute.xlu0 %662
  %664 = vrot.lane.b32.xlu0 %v645, 17
  %v665 = vpop.permute.xlu0 %664
  %v666 = vsel %vm363, %v663, %v665
  %v667 = vsel %vm363, %v665, %v663
  %v668 = vadd.f32 %v652, %v667
  %v669 = vadd.f32 %v653, %v666
  %670 = vrot.lane.b32.xlu0 %v646, 16
  %v671 = vpop.permute.xlu0 %670
  %672 = vrot.lane.b32.xlu0 %v647, 16
  %v673 = vpop.permute.xlu0 %672
  %v674 = vsel %vm372, %v671, %v673
  %v675 = vsel %vm372, %v673, %v671
  %v676 = vadd.f32 %v668, %v675
  %v677 = vadd.f32 %v669, %v674
  %678 = vrot.lane.b32.xlu0 %v648, 15
  %v679 = vpop.permute.xlu0 %678
  %680 = vrot.lane.b32.xlu0 %v649, 15
  %v681 = vpop.permute.xlu0 %680
  %v682 = vsel %vm381, %v679, %v681
  %v683 = vsel %vm381, %v681, %v679
  %v684 = vadd.f32 %v676, %v683
  %v685 = vadd.f32 %v677, %v682
  %686 = vrot.lane.b32.xlu0 %v650, 1
  %v687 = vpop.permute.xlu0 %686
  %688 = vrot.lane.b32.xlu0 %v651, 1
  %v689 = vpop.permute.xlu0 %688
  %v690 = vsel %vm390, %v687, %v689
  %v691 = vsel %vm390, %v689, %v687
  %v692 = vadd.f32 %v684, %v691
  %v693 = vadd.f32 %v685, %v690
  %694 = vrot.lane.b32.xlu0 %v654, 127
  %v695 = vpop.permute.xlu0 %694
  %696 = vrot.lane.b32.xlu0 %v655, 127
  %v697 = vpop.permute.xlu0 %696
  %v698 = vsel %vm399, %v695, %v697
  %v699 = vsel %vm399, %v697, %v695
  %700 = vrot.lane.b32.xlu0 %v656, 113
  %v701 = vpop.permute.xlu0 %700
  %702 = vrot.lane.b32.xlu0 %v657, 113
  %v703 = vpop.permute.xlu0 %702
  %v704 = vsel %vm406, %v701, %v703
  %v705 = vsel %vm406, %v703, %v701
  %v706 = vadd.f32 %v698, %v704
  %v707 = vadd.f32 %v699, %v705
  %708 = vrot.lane.b32.xlu0 %v658, 112
  %v709 = vpop.permute.xlu0 %708
  %710 = vrot.lane.b32.xlu0 %v659, 112
  %v711 = vpop.permute.xlu0 %710
  %v712 = vsel %vm415, %v709, %v711
  %v713 = vsel %vm415, %v711, %v709
  %v714 = vadd.f32 %v706, %v712
  %v715 = vadd.f32 %v707, %v713
  %716 = vrot.lane.b32.xlu0 %v660, 111
  %v717 = vpop.permute.xlu0 %716
  %718 = vrot.lane.b32.xlu0 %v661, 111
  %v719 = vpop.permute.xlu0 %718
  %v720 = vsel %vm424, %v717, %v719
  %v721 = vsel %vm424, %v719, %v717
  %v722 = vadd.f32 %v714, %v720
  %v723 = vadd.f32 %v715, %v721
  %v724 = vadd.f32 %v692, %v722
  %v725 = vadd.f32 %v693, %v723
  %s726 = scalar_lea.vmem %s7, 16
  %727 = vst [vmem:[%s726] sm:$0xff] %v724
  %728 = vst [vmem:[%s726 + $0x8] sm:$0xff] %v725
  // Predicated region
  $region30: #{dense_layer_forward.1} parent=0 // pred_check
    _
  $region31: #{dense_layer_forward.1} parent=0 // pred_check_branch
    %730 = sbr.rel (0) target = $region33
  $region32: #{dense_layer_forward.1} parent=0 // pred_region
    _
  $region33: #{dense_layer_forward.1} parent=0 // pred_fallthru
    _
  // Predicated region
  $region34: #{dense_layer_forward.1} parent=0 // pred_check
    _
  $region35: #{dense_layer_forward.1} parent=0 // pred_check_branch
    %732 = sbr.rel (0) target = $region37
  $region36: #{dense_layer_forward.1} parent=0 // pred_region
    _
  $region37: #{dense_layer_forward.1} parent=0 // pred_fallthru
    _

</llo_original>
